<compile_context>
chip_gen: v6e
topology: v6e:2x2x1
jax: 0.10.0
libtpu: 0.0.40
codegen_flags: <defaults>
</compile_context>

<pallas_src>
import jax
import jax.numpy as jnp
from jax.experimental import pallas as pl
from jax.experimental.pallas import tpu as pltpu

_LANE_CHOICES = (1024, 512, 256, 128)       # lane-dense last-dim candidates
_TARGET_BLOCK_BYTES = 6 * 1024 * 1024       # ~6 MiB per block
_VMEM_LIMIT_BYTES = 40 * 1024 * 1024        # explicit scoped-VMEM headroom

_NUM_CORES_CACHE = None


def _capped_relu_kernel(cap_ref, x_ref, o_ref):
    x = x_ref[...]
    # NOTE: cap is cast to the tensor dtype before the compare (matches
    # torch.clamp-in-tensor-dtype semantics; truncates fractional caps for
    # integer dtypes).
    cap = cap_ref[0].astype(x.dtype)
    zero = jnp.zeros((), x.dtype)
    o_ref[...] = jnp.minimum(jnp.maximum(x, zero), cap)


def _round_up(a, b):
    return -(-a // b) * b


def _num_tensorcores():
    """Best-effort TensorCore-per-device count (v7x megacore balance)."""
    global _NUM_CORES_CACHE
    if _NUM_CORES_CACHE is not None:
        return _NUM_CORES_CACHE
    n_cores = 1
    try:
        info = pltpu.get_tpu_info()
        for attr in ("num_cores", "tensor_cores_per_chip", "cores_per_chip"):
            v = getattr(info, attr, None)
            if isinstance(v, int) and v > 0:
                n_cores = v
                break
    except Exception:
        pass
    if n_cores == 1:
        try:
            d = jax.devices()[0]
            for attr in ("num_cores", "core_count"):
                v = getattr(d, attr, None)
                if isinstance(v, int) and v > 0:
                    n_cores = v
                    break
        except Exception:
            pass
    _NUM_CORES_CACHE = max(1, n_cores)
    return _NUM_CORES_CACHE


def _choose_block_rows(rows, lanes, sub, itemsize, num_cores):
    """Pick (sub,128)-aligned block rows near the ~6 MiB target."""
    if rows <= sub:
        return rows  # equals full second-to-last dim -> legal, grid=(1,)
    rows_sub = _round_up(rows, sub)
    target_rows = max(sub,
                      (_TARGET_BLOCK_BYTES // (lanes * itemsize)) // sub * sub)
    if num_cores <= 1:
        # Single TensorCore (v5e/v6e): no point splitting below target size.
        return min(target_rows, rows_sub)
    # Multi TensorCore (v7x): program count a multiple of num_cores and
    # >= 4 programs per core, shrinking blocks only as much as needed.
    min_progs = 4 * num_cores
    progs = max(pl.cdiv(rows, target_rows), min_progs)
    progs = _round_up(progs, num_cores)
    block_rows = max(sub, _round_up(pl.cdiv(rows, progs), sub))
    return min(block_rows, target_rows, rows_sub)


def _capped_relu_2d(x2d, cap_arr, block_rows, lanes):
    rows = x2d.shape[0]
    grid = (pl.cdiv(rows, block_rows),)
    return pl.pallas_call(
        _capped_relu_kernel,
        out_shape=jax.ShapeDtypeStruct(x2d.shape, x2d.dtype),
        grid_spec=pltpu.PrefetchScalarGridSpec(
            num_scalar_prefetch=0,
            grid=grid,
            in_specs=[
                pl.BlockSpec(memory_space=pltpu.MemorySpace.SMEM),      # cap
                pl.BlockSpec((block_rows, lanes), lambda i: (i, 0)),    # x
            ],
            out_specs=pl.BlockSpec((block_rows, lanes), lambda i: (i, 0)),
        ),
        compiler_params=pltpu.CompilerParams(
            dimension_semantics=("parallel",),
            vmem_limit_bytes=_VMEM_LIMIT_BYTES),
    )(cap_arr, x2d)


def capped_relu(x, cap=1.0):
    """Elementwise clamp(x, 0, cap) == torch.clamp(x, min=0, max=cap)."""
    orig_shape = x.shape
    dtype = x.dtype
    total = x.size
    if total == 0:
        return x

    itemsize = jnp.dtype(dtype).itemsize
    sub = max(8, 32 // itemsize)          # f32: 8, bf16: 16, int8/fp8: 32
    num_cores = _num_tensorcores()

    # Works for Python floats and traced jnp scalars (no retrace per cap).
    cap_arr = jnp.asarray(cap, dtype=jnp.float32).reshape((1,))

    flat = x.reshape(-1)                  # metadata-only for contiguous input
    tail = total % 128
    bulk = total - tail

    out_parts = []
    if bulk > 0:
        lanes = next(l for l in _LANE_CHOICES if bulk % l == 0)
        rows = bulk // lanes
        block_rows = _choose_block_rows(rows, lanes, sub, itemsize, num_cores)
        bulk_flat = flat[:bulk] if tail else flat
        out2d = _capped_relu_2d(bulk_flat.reshape(rows, lanes), cap_arr,
                                block_rows, lanes)
        out_parts.append(out2d.reshape(-1))
    if tail > 0:
        # <128-element remainder: tiny plain-JAX clip instead of padding and
        # re-slicing the whole tensor (saves 2 full HBM passes on ragged sizes).
        cap_t = cap_arr[0].astype(dtype)
        t = flat[bulk:]
        out_parts.append(jnp.minimum(jnp.maximum(t, jnp.zeros((), dtype)),
                                     cap_t))

    out_flat = out_parts[0] if len(out_parts) == 1 else jnp.concatenate(out_parts)
    return out_flat.reshape(orig_shape)


if __name__ == "__main__":
    key = jax.random.PRNGKey(0)
    cap = 1.0

    # Small NCHW input consistent with a conv-style activation (2048 elems,
    # divisible by 1024 -> pure zero-copy kernel path).
    x = jax.random.normal(key, (2, 4, 16, 16), dtype=jnp.float32) * 2.0
    y = jax.block_until_ready(capped_relu(x, cap=cap))
    y_ref = jnp.clip(x, 0.0, cap)
    assert y.shape == x.shape and y.dtype == x.dtype
    assert jnp.allclose(y, y_ref), "mismatch vs reference (divisible path)"

    # Ragged-size input (240 = 128 bulk + 112 tail) exercises the bulk+tail path.
    x2 = jax.random.normal(jax.random.PRNGKey(1), (2, 3, 40),
                           dtype=jnp.float32) * 2.0
    y2 = jax.block_until_ready(capped_relu(x2, cap=cap))
    assert jnp.allclose(y2, jnp.clip(x2, 0.0, cap)), "mismatch (ragged path)"

    print("KERNEL_OK")
</pallas_src>

<mosaic_0001>
module attributes {stable_mosaic.version = 11 : i64} {
  func.func @_capped_relu_kernel(%arg0: i32, %arg1: memref<1xf32, #tpu.memory_space<smem>>, %arg2: memref<2x1024xf32, #tpu.memory_space<vmem>>, %arg3: memref<2x1024xf32, #tpu.memory_space<vmem>>) attributes {dimension_semantics = [#tpu.dimension_semantics<parallel>], iteration_bounds = array<i64: 1>, scalar_prefetch = 0 : i64, scratch_operands = 0 : i64, tpu.core_type = #tpu.core_type<tc>, window_params = [{transform_indices = @transform_0, window_bounds = array<i64: 1>}, {transform_indices = @transform_1, window_bounds = array<i64: 2, 1024>}, {transform_indices = @transform_2, window_bounds = array<i64: 2, 1024>}]} {
    %c0 = arith.constant 0 : index
    %c0_0 = arith.constant 0 : index
    %0 = vector.load %arg2[%c0, %c0_0] : memref<2x1024xf32, #tpu.memory_space<vmem>>, vector<2x1024xf32>
    %c0_1 = arith.constant 0 : index
    %1 = memref.load %arg1[%c0_1] : memref<1xf32, #tpu.memory_space<smem>>
    %cst = arith.constant 0.000000e+00 : f32
    %2 = vector.broadcast %cst : f32 to vector<2x1024xf32>
    %3 = arith.maximumf %0, %2 : vector<2x1024xf32>
    %4 = vector.broadcast %1 : f32 to vector<2x1024xf32>
    %5 = arith.minimumf %3, %4 : vector<2x1024xf32>
    %c0_2 = arith.constant 0 : index
    %c0_3 = arith.constant 0 : index
    %6 = vector.load %arg3[%c0_2, %c0_3] : memref<2x1024xf32, #tpu.memory_space<vmem>>, vector<2x1024xf32>
    tpu.vector_store %arg3[%c0_2, %c0_3], %5 {strides = array<i32>} : memref<2x1024xf32, #tpu.memory_space<vmem>>, vector<2x1024xf32>,
    return
  }
  func.func @transform_0(%arg0: i32) -> i32 {
    %c0_i32 = arith.constant 0 : i32
    %c0_i32_0 = arith.constant 0 : i32
    return %c0_i32 : i32
  }
  func.func @transform_1(%arg0: i32) -> (i32, i32) {
    %c0_i32 = arith.constant 0 : i32
    %c0_i32_0 = arith.constant 0 : i32
    return %arg0, %c0_i32 : i32, i32
  }
  func.func @transform_2(%arg0: i32) -> (i32, i32) {
    %c0_i32 = arith.constant 0 : i32
    %c0_i32_0 = arith.constant 0 : i32
    return %arg0, %c0_i32 : i32, i32
  }
}

</mosaic_0001>

<llo_original>
// kernel: tpu_custom_call.1
$region0: #{tpu_custom_call.1}
  #allocation0 [shape = 'u32[]', space=smem, size = 0x4, offset = 0x4, fixed_abs, tag = 'smem constant byte address 0x4 - core index']
  #allocation1 [shape = 'u32[144,128]{1,0:T(1,128)}', space=vmem, size = 0x12000, scoped, tag = 'internal scratch']
  #allocation2 [shape = 'f32[1]{0:T(128)S(6)}', space=smem, size = 0x200, scoped, tag = 'scoped memory for tpu_custom_call.1']
  %s0 = inlined_call_operand.<no memory space> [shape: f32[1], index: 0, kind: input, shape index: {}]
  %s1 = inlined_call_operand.hbm [shape: f32[2,1024], index: 1, kind: input, shape index: {}]
  %s2 = inlined_call_operand.hbm [shape: f32[2,1024], index: 2, kind: output, shape index: {}]
  %s3 = sld [smem:[#allocation0]]
  $region22: #{tpu_custom_call.1} parent=0
    _
  %s5 = ssub.s32 1, %s3
  %s6 = scalar_select 0, %s5, %s3
  %7 = sst [smem:[#allocation2]] %s0
  $region1: #{tpu_custom_call.1} parent=0
    #allocation3 [shape = 'u8[8192]{0}', space=vmem, size = 0x2000, scoped, tag = 'input window, operand 1, single buffered']
    #allocation4 [shape = 's32[1]{0}', space=sflag, size = 0x4, scoped, tag = 'scoped memory for tpu_custom_call.1']
    #allocation5 [shape = 's32[1]{0}', space=sflag, size = 0x4, scoped, tag = 'scoped memory for tpu_custom_call.1']
    #allocation6 [shape = 'u8[8192]{0}', space=vmem, size = 0x2000, scoped, tag = 'output window, operand 0, single buffered']
    %8 = vsyncpa [#allocation4], 0
    %9 = vsyncpa [#allocation5], 0
    // Predicated region
    $region2: #{tpu_custom_call.1} parent=1 // pred_check
      _
    $region3: #{tpu_custom_call.1} parent=1 // pred_check_branch
      %11 = sbr.rel (0) target = $region5
    $region4: #{tpu_custom_call.1} parent=1 // pred_region
      _
    $region5: #{tpu_custom_call.1} parent=1 // pred_fallthru
      _
    // Predicated region
    $region6: #{tpu_custom_call.1} parent=1 // pred_check
      _
    $region7: #{tpu_custom_call.1} parent=1 // pred_check_branch
      %13 = sbr.rel (0) target = $region9
    $region8: #{tpu_custom_call.1} parent=1 // pred_region
      %s15 = ssub.s32 256, 256
      %16 = vsyncadd [#allocation4], %s15
      %s18 = sshll.u32 [#allocation3], 4
      %s19 = int_to_ptr.vmem [resolvable:$true] %s18
      %21 = dma.hbm_to_vmem [thread:$0]  %s1, 256, %s19, [#allocation4]
    $region9: #{tpu_custom_call.1} parent=1 // pred_fallthru
      _
    // Predicated region
    $region10: #{tpu_custom_call.1} parent=1 // pred_check
      _
    $region11: #{tpu_custom_call.1} parent=1 // pred_check_branch
      %23 = sbr.rel (0) target = $region13
    $region12: #{tpu_custom_call.1} parent=1 // pred_region
      %24 = dma.done [#allocation4], 256
    $region13: #{tpu_custom_call.1} parent=1 // pred_fallthru
      _
    %v25 = vld [vmem:[#allocation3] sm:$0xff]
    %v26 = vld [vmem:[#allocation3 + $0x8] sm:$0xff]
    %s27 = sld [smem:[#allocation2]]
    %v28 = vmax.f32 %v25, 0.0
    %v29 = vmax.f32 %v26, 0.0
    %v30 = vstv %s27
    %v31 = vmin.f32 %v28, %v30
    %v32 = vmin.f32 %v29, %v30
    %33 = vst [vmem:[#allocation6] sm:$0xff] %v31
    %34 = vst [vmem:[#allocation6 + $0x8] sm:$0xff] %v32
    // Predicated region
    $region14: #{tpu_custom_call.1} parent=1 // pred_check
      _
    $region15: #{tpu_custom_call.1} parent=1 // pred_check_branch
      %36 = sbr.rel (0) target = $region17
    $region16: #{tpu_custom_call.1} parent=1 // pred_region
      %s38 = ssub.s32 256, 256
      %39 = vsyncadd [#allocation5], %s38
      %s41 = sshll.u32 [#allocation6], 4
      %s42 = int_to_ptr.vmem [resolvable:$true] %s41
      %44 = dma.vmem_to_hbm [thread:$0]  %s42, 256, %s2, [#allocation5]
    $region17: #{tpu_custom_call.1} parent=1 // pred_fallthru
      _
    // Predicated region
    $region18: #{tpu_custom_call.1} parent=1 // pred_check
      _
    $region19: #{tpu_custom_call.1} parent=1 // pred_check_branch
      %46 = sbr.rel (0) target = $region21
    $region20: #{tpu_custom_call.1} parent=1 // pred_region
      %47 = dma.done [#allocation5], 256
    $region21: #{tpu_custom_call.1} parent=1 // pred_fallthru
      _
    %48 = vsyncpa [#allocation4], 1
    %49 = vsyncpa [#allocation5], 1

</llo_original>
